<compile_context>
chip_gen: v6e
topology: v6e:2x2x1
jax: 0.10.0
libtpu: 0.0.40
codegen_flags: <defaults>
</compile_context>

<pallas_src>
import math

import jax
import jax.numpy as jnp
from jax.experimental import pallas as pl
from jax.experimental.pallas import tpu as pltpu


def _round_up(v, m):
    return ((v + m - 1) // m) * m


def linear_kernel(x_ref, params_ref, o_ref):
    # x_ref:      (3, TILE_N) VMEM, batch along lanes.
    # params_ref: (4,) f32 SMEM -> (w0, w1, w2, b), read as scalars.
    # o_ref:      (1, TILE_N) lane-dense output tile.
    w0 = params_ref[0]
    w1 = params_ref[1]
    w2 = params_ref[2]
    b = params_ref[3]
    x = x_ref[...].astype(jnp.float32)  # (3, TILE_N)
    y = w0 * x[0:1, :] + w1 * x[1:2, :] + w2 * x[2:3, :] + b
    o_ref[...] = y.astype(o_ref.dtype)


def net_forward(x, weight, bias, *, tile_n_max=2048):
    """Pallas equivalent of Net.forward: y = x @ weight.T + bias.

    x: (N, 3), weight: (1, 3), bias: (1,)  ->  (N, 1)
    """
    n, k = x.shape
    assert k == 3 and weight.shape == (1, 3) and bias.shape == (1,)

    # Lane-major layout: batch N on the 128-lane axis, padded to a tile multiple.
    tile_n = _round_up(min(tile_n_max, _round_up(n, 128)), 128)
    n_pad = _round_up(n, tile_n)
    x_t = x.T  # (3, N)
    if n_pad != n:
        x_t = jnp.pad(x_t, ((0, 0), (0, n_pad - n)))

    # Pack (w0, w1, w2, b) into a tiny SMEM-resident scalar vector.
    params = jnp.concatenate(
        [weight.reshape(-1), bias.reshape(-1)]
    ).astype(jnp.float32)  # (4,)

    out = pl.pallas_call(
        linear_kernel,
        out_shape=jax.ShapeDtypeStruct((1, n_pad), x.dtype),
        grid=(n_pad // tile_n,),
        in_specs=[
            pl.BlockSpec((3, tile_n), lambda i: (0, i)),
            pl.BlockSpec(memory_space=pltpu.MemorySpace.SMEM),
        ],
        out_specs=pl.BlockSpec((1, tile_n), lambda i: (0, i)),
        compiler_params=pltpu.CompilerParams(
            dimension_semantics=("parallel",)
        ),
    )(x_t, params)

    return out[0, :n].reshape(n, 1)


# TODO(synk): L1Loss / SGD training loop from Net are not part of forward();
# only the forward pass is implemented as a kernel.


if __name__ == "__main__":
    key = jax.random.PRNGKey(0)
    k_x, k_w, k_b, k_x2 = jax.random.split(key, 4)

    # nn.Linear(3, 1) params: weight (1, 3), bias (1,), U(-1/sqrt(3), 1/sqrt(3)).
    bound = 1.0 / math.sqrt(3.0)
    weight = jax.random.uniform(k_w, (1, 3), jnp.float32, -bound, bound)
    bias = jax.random.uniform(k_b, (1,), jnp.float32, -bound, bound)

    # Input consistent with getRandomData: (N, 3) in [60, 100).
    n = 8
    x = jax.random.uniform(k_x, (n, 3), jnp.float32) * 40.0 + 60.0

    out = net_forward(x, weight, bias)
    out = jax.block_until_ready(out)

    ref = x @ weight.T + bias.reshape(1, 1)
    assert out.shape == (n, 1)
    assert jnp.allclose(out, ref, atol=1e-5, rtol=1e-5)

    # Exercise the multi-tile / padded path as well (grid of 3 blocks).
    n2 = 300
    x2 = jax.random.uniform(k_x2, (n2, 3), jnp.float32) * 40.0 + 60.0
    out2 = jax.block_until_ready(net_forward(x2, weight, bias, tile_n_max=128))
    ref2 = x2 @ weight.T + bias.reshape(1, 1)
    assert out2.shape == (n2, 1)
    assert jnp.allclose(out2, ref2, atol=1e-5, rtol=1e-5)

    print("KERNEL_OK")
</pallas_src>

<mosaic_0001>
module attributes {stable_mosaic.version = 11 : i64} {
  func.func @linear_kernel(%arg0: i32, %arg1: memref<3x128xf32, #tpu.memory_space<vmem>>, %arg2: memref<4xf32, #tpu.memory_space<smem>>, %arg3: memref<1x128xf32, #tpu.memory_space<vmem>>) attributes {dimension_semantics = [#tpu.dimension_semantics<parallel>], iteration_bounds = array<i64: 1>, scalar_prefetch = 0 : i64, scratch_operands = 0 : i64, tpu.core_type = #tpu.core_type<tc>, window_params = [{transform_indices = @transform_0, window_bounds = array<i64: 3, 128>}, {transform_indices = @transform_1, window_bounds = array<i64: 4>}, {transform_indices = @transform_2, window_bounds = array<i64: 1, 128>}]} {
    %c0 = arith.constant 0 : index
    %0 = memref.load %arg2[%c0] : memref<4xf32, #tpu.memory_space<smem>>
    %c1 = arith.constant 1 : index
    %1 = memref.load %arg2[%c1] : memref<4xf32, #tpu.memory_space<smem>>
    %c2 = arith.constant 2 : index
    %2 = memref.load %arg2[%c2] : memref<4xf32, #tpu.memory_space<smem>>
    %c3 = arith.constant 3 : index
    %3 = memref.load %arg2[%c3] : memref<4xf32, #tpu.memory_space<smem>>
    %c0_0 = arith.constant 0 : index
    %c0_1 = arith.constant 0 : index
    %4 = vector.load %arg1[%c0_0, %c0_1] : memref<3x128xf32, #tpu.memory_space<vmem>>, vector<3x128xf32>
    %5 = vector.extract_strided_slice %4 {offsets = [0, 0], sizes = [1, 128], strides = [1, 1]} : vector<3x128xf32> to vector<1x128xf32>
    %6 = vector.broadcast %0 : f32 to vector<1x128xf32>
    %7 = arith.mulf %6, %5 : vector<1x128xf32>
    %8 = vector.extract_strided_slice %4 {offsets = [1, 0], sizes = [1, 128], strides = [1, 1]} : vector<3x128xf32> to vector<1x128xf32>
    %9 = vector.broadcast %1 : f32 to vector<1x128xf32>
    %10 = arith.mulf %9, %8 : vector<1x128xf32>
    %11 = arith.addf %7, %10 : vector<1x128xf32>
    %12 = vector.extract_strided_slice %4 {offsets = [2, 0], sizes = [1, 128], strides = [1, 1]} : vector<3x128xf32> to vector<1x128xf32>
    %13 = vector.broadcast %2 : f32 to vector<1x128xf32>
    %14 = arith.mulf %13, %12 : vector<1x128xf32>
    %15 = arith.addf %11, %14 : vector<1x128xf32>
    %16 = vector.broadcast %3 : f32 to vector<1x128xf32>
    %17 = arith.addf %15, %16 : vector<1x128xf32>
    %c0_2 = arith.constant 0 : index
    %c0_3 = arith.constant 0 : index
    %18 = vector.load %arg3[%c0_2, %c0_3] : memref<1x128xf32, #tpu.memory_space<vmem>>, vector<1x128xf32>
    tpu.vector_store %arg3[%c0_2, %c0_3], %17 {strides = array<i32>} : memref<1x128xf32, #tpu.memory_space<vmem>>, vector<1x128xf32>,
    return
  }
  func.func @transform_0(%arg0: i32) -> (i32, i32) {
    %c0_i32 = arith.constant 0 : i32
    %c0_i32_0 = arith.constant 0 : i32
    return %c0_i32, %arg0 : i32, i32
  }
  func.func @transform_1(%arg0: i32) -> i32 {
    %c0_i32 = arith.constant 0 : i32
    %c0_i32_0 = arith.constant 0 : i32
    return %c0_i32 : i32
  }
  func.func @transform_2(%arg0: i32) -> (i32, i32) {
    %c0_i32 = arith.constant 0 : i32
    %c0_i32_0 = arith.constant 0 : i32
    return %c0_i32, %arg0 : i32, i32
  }
}

</mosaic_0001>

<llo_original>
// kernel: tpu_custom_call.1
$region0: #{tpu_custom_call.1}
  #allocation0 [shape = 'u32[]', space=smem, size = 0x4, offset = 0x4, fixed_abs, tag = 'smem constant byte address 0x4 - core index']
  #allocation1 [shape = 'u32[144,128]{1,0:T(1,128)}', space=vmem, size = 0x12000, scoped, tag = 'internal scratch']
  %s0 = inlined_call_operand.hbm [shape: f32[3,128], index: 0, kind: input, shape index: {}]
  %s1 = inlined_call_operand.vmem [shape: f32[4], index: 1, kind: input, shape index: {}]
  %s2 = inlined_call_operand.hbm [shape: f32[1,128], index: 2, kind: output, shape index: {}]
  %s3 = sld [smem:[#allocation0]]
  $region26: #{tpu_custom_call.1} parent=0
    _
  %s5 = ssub.s32 1, %s3
  %s6 = scalar_select 0, %s5, %s3
  $region1: #{tpu_custom_call.1} parent=0
    #allocation2 [shape = 'u8[2048]{0}', space=vmem, size = 0x800, scoped, tag = 'input window, operand 0, single buffered']
    #allocation3 [shape = 's32[1]{0}', space=sflag, size = 0x4, scoped, tag = 'scoped memory for tpu_custom_call.1']
    #allocation4 [shape = 's32[1]{0}', space=sflag, size = 0x4, scoped, tag = 'scoped memory for tpu_custom_call.1']
    #allocation5 [shape = 's32[1]{0}', space=sflag, size = 0x4, scoped, tag = 'scoped memory for tpu_custom_call.1']
    #allocation6 [shape = 'u8[512]{0}', space=smem, size = 0x200, scoped, tag = 'input window, operand 1, single buffered']
    #allocation7 [shape = 'u8[512]{0}', space=vmem, size = 0x400, scoped, tag = 'output window, operand 0, single buffered']
    %7 = vsyncpa [#allocation3], 0
    %8 = vsyncpa [#allocation5], 0
    %9 = vsyncpa [#allocation4], 0
    // Predicated region
    $region2: #{tpu_custom_call.1} parent=1 // pred_check
      _
    $region3: #{tpu_custom_call.1} parent=1 // pred_check_branch
      %11 = sbr.rel (0) target = $region5
    $region4: #{tpu_custom_call.1} parent=1 // pred_region
      %s13 = ssub.s32 64, 64
      %14 = vsyncadd [#allocation3], %s13
      %s16 = sshll.u32 [#allocation2], 4
      %s17 = int_to_ptr.vmem [resolvable:$true] %s16
      %19 = dma.hbm_to_vmem [thread:$0]  %s0, 64, %s17, [#allocation3]
    $region5: #{tpu_custom_call.1} parent=1 // pred_fallthru
      _
    // Predicated region
    $region6: #{tpu_custom_call.1} parent=1 // pred_check
      _
    $region7: #{tpu_custom_call.1} parent=1 // pred_check_branch
      %21 = sbr.rel (0) target = $region9
    $region8: #{tpu_custom_call.1} parent=1 // pred_region
      %s23 = ssub.s32 16, 16
      %24 = vsyncadd [#allocation5], %s23
      %s26 = sshll.u32 %s1, 4
      %s27 = int_to_ptr.vmem [resolvable:$true] %s26
      %29 = dma.vmem_to_smem %s27, 16, [#allocation6], [#allocation5]
    $region9: #{tpu_custom_call.1} parent=1 // pred_fallthru
      _
    // Predicated region
    $region10: #{tpu_custom_call.1} parent=1 // pred_check
      _
    $region11: #{tpu_custom_call.1} parent=1 // pred_check_branch
      %31 = sbr.rel (0) target = $region13
    $region12: #{tpu_custom_call.1} parent=1 // pred_region
      %32 = dma.done [#allocation3], 64
    $region13: #{tpu_custom_call.1} parent=1 // pred_fallthru
      _
    // Predicated region
    $region14: #{tpu_custom_call.1} parent=1 // pred_check
      _
    $region15: #{tpu_custom_call.1} parent=1 // pred_check_branch
      %34 = sbr.rel (0) target = $region17
    $region16: #{tpu_custom_call.1} parent=1 // pred_region
      %35 = dma.done [#allocation5], 16
    $region17: #{tpu_custom_call.1} parent=1 // pred_fallthru
      _
    %36 = sfence
    %s37 = sld [smem:[#allocation6]]
    %s38 = sld [smem:[#allocation6 + $0x1]]
    %s39 = sld [smem:[#allocation6 + $0x2]]
    %s40 = sld [smem:[#allocation6 + $0x3]]
    %v41 = vld [vmem:[#allocation2] sm:$0x7]
    %v42 = vstv %s37
    %v43 = vmul.f32 %v42, %v41
    %v44 = vstv %s38
    %v45 = vmul.f32 %v44, %v41
    %v47 = vrot.slane %v45, 1
    %v49 = vadd.f32 %v43, %v47
    %v50 = vstv %s39
    %v51 = vmul.f32 %v50, %v41
    %v53 = vrot.slane %v51, 2
    %v55 = vadd.f32 %v49, %v53
    %v56 = vstv %s40
    %v57 = vadd.f32 %v55, %v56
    %58 = vst [vmem:[#allocation7] sm:$0x1] %v57
    // Predicated region
    $region18: #{tpu_custom_call.1} parent=1 // pred_check
      _
    $region19: #{tpu_custom_call.1} parent=1 // pred_check_branch
      %60 = sbr.rel (0) target = $region21
    $region20: #{tpu_custom_call.1} parent=1 // pred_region
      %s62 = ssub.s32 16, 16
      %63 = vsyncadd [#allocation4], %s62
      %s65 = sshll.u32 [#allocation7], 4
      %s66 = int_to_ptr.vmem [resolvable:$true] %s65
      %68 = dma.vmem_to_hbm [thread:$0]  %s66, 16, %s2, [#allocation4]
    $region21: #{tpu_custom_call.1} parent=1 // pred_fallthru
      _
    // Predicated region
    $region22: #{tpu_custom_call.1} parent=1 // pred_check
      _
    $region23: #{tpu_custom_call.1} parent=1 // pred_check_branch
      %70 = sbr.rel (0) target = $region25
    $region24: #{tpu_custom_call.1} parent=1 // pred_region
      %71 = dma.done [#allocation4], 16
    $region25: #{tpu_custom_call.1} parent=1 // pred_fallthru
      _
    %72 = vsyncpa [#allocation3], 1
    %73 = vsyncpa [#allocation4], 1
    %74 = vsyncpa [#allocation5], 1

</llo_original>
